<compile_context>
chip_gen: v6e
topology: v6e:2x2x1
jax: 0.10.0
libtpu: 0.0.40
codegen_flags: <defaults>
</compile_context>

<pallas_src>
import jax
import jax.numpy as jnp
from jax.experimental import pallas as pl
from jax.experimental.pallas import tpu as pltpu


def _make_frob_norm_kernel(single_step, need_mask, tile_rows, lanes, last_valid_rows):
    """Sum of squared differences over a 1-D reduction grid; sqrt in the epilogue."""

    if single_step:
        # Whole slab in one block: no accumulator, no init, no mask (block == array).
        def kernel(pred_ref, tgt_ref, out_ref):
            d = pred_ref[...].astype(jnp.float32) - tgt_ref[...].astype(jnp.float32)
            out_ref[...] = jnp.sqrt(jnp.sum(d * d, keepdims=True))

        return kernel

    groups = tile_rows // 8  # tile_rows is a multiple of 32 on this path

    def fold(sq):
        # Fold the (tile_rows, lanes) tile into the single (8, lanes) vreg-group
        # accumulator with sublane-group VPU adds (reshape follows (8,128) tiling,
        # so it does not cross vreg tile boundaries).
        return sq.reshape(groups, 8, lanes).sum(axis=0)

    def kernel(pred_ref, tgt_ref, out_ref, acc_ref):
        i = pl.program_id(0)
        nsteps = pl.num_programs(0)

        @pl.when(i == 0)
        def _():
            acc_ref[...] = jnp.zeros_like(acc_ref)

        # Upcast in-kernel (VPU); inputs stream from HBM in native dtype.
        d = pred_ref[...].astype(jnp.float32) - tgt_ref[...].astype(jnp.float32)
        sq = d * d

        if need_mask:
            # Mask only on the final (ragged) step; steady state is unmasked.
            @pl.when(i < nsteps - 1)
            def _():
                acc_ref[...] += fold(sq)

            @pl.when(i == nsteps - 1)
            def _():
                row_ids = jax.lax.broadcasted_iota(jnp.int32, (tile_rows, lanes), 0)
                acc_ref[...] += fold(jnp.where(row_ids < last_valid_rows, sq, 0.0))
        else:
            acc_ref[...] += fold(sq)

        @pl.when(i == nsteps - 1)
        def _():
            # Single cross-lane (XLU) reduce + sqrt, once per kernel.
            out_ref[...] = jnp.sqrt(jnp.sum(acc_ref[...], keepdims=True))

    return kernel


def representation_loss(pred_rep, target_rep, *, tile_rows=None, lanes=128,
                        target_block_bytes=2 * 1024 * 1024):
    """Frobenius norm of (pred_rep - target_rep), like torch.linalg.norm."""
    assert pred_rep.shape == target_rep.shape

    total = int(pred_rep.size)
    if total == 0:
        return jnp.float32(0.0)

    # Flatten in native dtype (no wrapper-side upcast; free for contiguous reps).
    p = jnp.ravel(pred_rep)
    t = jnp.ravel(target_rep)

    if total % lanes != 0:
        # Rare fallback: pad only to the next full lane row (<=127 zeros; zeros
        # cancel exactly in the difference).
        # TODO(synk): for very large non-lane-aligned reps jnp.pad still copies the
        # tensors once in HBM; a main-slab-kernel + tiny-jnp-tail split would avoid it.
        padded = ((total + lanes - 1) // lanes) * lanes
        p = jnp.pad(p, (0, padded - total))
        t = jnp.pad(t, (0, padded - total))
        total = padded

    rows = total // lanes
    p = p.reshape(rows, lanes)
    t = t.reshape(rows, lanes)

    # Block sizing by bytes: ~2 MiB HBM traffic per input block regardless of dtype,
    # so per-step pipeline overhead stays <10% (f32 -> 4096 rows, bf16 -> 8192 rows).
    if tile_rows is None:
        tile_rows = target_block_bytes // (lanes * p.dtype.itemsize)
    tile_rows = max(32, (int(tile_rows) // 32) * 32)  # sublane-aligned for any dtype
    if tile_rows >= rows:
        tile_rows = rows  # whole-slab single block (always a legal full-extent block)

    grid_steps = pl.cdiv(rows, tile_rows)
    single_step = grid_steps == 1
    need_mask = (not single_step) and (rows % tile_rows != 0)
    last_valid_rows = rows - (grid_steps - 1) * tile_rows  # static Python int

    kernel = _make_frob_norm_kernel(single_step, need_mask, tile_rows, lanes,
                                    last_valid_rows)

    scratch_shapes = [] if single_step else [pltpu.VMEM((8, lanes), jnp.float32)]

    out = pl.pallas_call(
        kernel,
        out_shape=jax.ShapeDtypeStruct((1, 1), jnp.float32),
        grid_spec=pltpu.PrefetchScalarGridSpec(
            num_scalar_prefetch=0,
            grid=(grid_steps,),
            in_specs=[
                pl.BlockSpec((tile_rows, lanes), lambda i: (i, 0)),
                pl.BlockSpec((tile_rows, lanes), lambda i: (i, 0)),
            ],
            out_specs=pl.BlockSpec((1, 1), lambda i: (0, 0)),
            scratch_shapes=scratch_shapes,
        ),
        compiler_params=pltpu.CompilerParams(
            # Reduction axis carries the accumulator -> must stay sequential.
            dimension_semantics=("arbitrary",),
        ),
    )(p, t)
    return out[0, 0]


# TODO(synk): RepresentationLoss.get_dino_rep runs a pretrained DINO ResNet-50
# (torch.hub checkpoint); that inference path is out of scope for a synthetic
# Pallas kernel and is not reproduced here.
# TODO(synk): optional v7x-only 2-TensorCore split of the reduction (leading
# "parallel" grid axis writing per-core partials, combined in the wrapper) is left
# out to keep one verified code path for all TPU generations.


if __name__ == "__main__":
    key = jax.random.PRNGKey(0)
    k1, k2, k3, k4, k5, k6 = jax.random.split(key, 6)

    # 1) DINO-like rep [B, 2048], f32, lane-aligned -> zero-copy single-step fast path.
    pred = jax.random.normal(k1, (2, 2048), dtype=jnp.float32)
    tgt = jax.random.normal(k2, (2, 2048), dtype=jnp.float32)
    loss = jax.block_until_ready(representation_loss(pred, tgt))
    ref = jnp.linalg.norm(pred - tgt)
    assert jnp.allclose(loss, ref, rtol=1e-5, atol=1e-5), (loss, ref)

    # 2) Multi-step grid with a ragged final tile (exercises the last-step-only mask).
    pred2 = jax.random.normal(k3, (5, 2048), dtype=jnp.float32)
    tgt2 = jax.random.normal(k4, (5, 2048), dtype=jnp.float32)
    loss2 = jax.block_until_ready(representation_loss(pred2, tgt2, tile_rows=32))
    ref2 = jnp.linalg.norm(pred2 - tgt2)
    assert jnp.allclose(loss2, ref2, rtol=1e-5, atol=1e-5), (loss2, ref2)

    # 3) Multi-step grid, evenly divisible (unmasked accumulate + (8,128) fold path).
    pred3 = jax.random.normal(k5, (16, 2048), dtype=jnp.float32)
    tgt3 = jax.random.normal(k6, (16, 2048), dtype=jnp.float32)
    loss3 = jax.block_until_ready(representation_loss(pred3, tgt3, tile_rows=64))
    ref3 = jnp.linalg.norm(pred3 - tgt3)
    assert jnp.allclose(loss3, ref3, rtol=1e-5, atol=1e-5), (loss3, ref3)

    # 4) Odd, non-128-aligned shape -> minimal-pad fallback path (zeros cancel).
    pred4 = jax.random.normal(k1, (3, 50, 7), dtype=jnp.float32)
    tgt4 = jax.random.normal(k2, (3, 50, 7), dtype=jnp.float32)
    loss4 = jax.block_until_ready(representation_loss(pred4, tgt4))
    ref4 = jnp.linalg.norm(pred4 - tgt4)
    assert jnp.allclose(loss4, ref4, rtol=1e-5, atol=1e-5), (loss4, ref4)

    # 5) bf16 reps streamed natively (half the HBM bytes), upcast in-kernel; fast path.
    predb = pred.astype(jnp.bfloat16)
    tgtb = tgt.astype(jnp.bfloat16)
    lossb = jax.block_until_ready(representation_loss(predb, tgtb))
    refb = jnp.linalg.norm(predb.astype(jnp.float32) - tgtb.astype(jnp.float32))
    assert jnp.allclose(lossb, refb, rtol=1e-3, atol=1e-3), (lossb, refb)

    # 6) bf16 multi-step with ragged final tile (mask + in-kernel upcast together).
    predb2 = pred2.astype(jnp.bfloat16)
    tgtb2 = tgt2.astype(jnp.bfloat16)
    lossb2 = jax.block_until_ready(representation_loss(predb2, tgtb2, tile_rows=32))
    refb2 = jnp.linalg.norm(predb2.astype(jnp.float32) - tgtb2.astype(jnp.float32))
    assert jnp.allclose(lossb2, refb2, rtol=1e-3, atol=1e-3), (lossb2, refb2)

    print("KERNEL_OK")
</pallas_src>

<mosaic_0001>
module attributes {stable_mosaic.version = 11 : i64} {
  func.func @kernel(%arg0: i32, %arg1: memref<32x128xf32, #tpu.memory_space<vmem>>, %arg2: memref<32x128xf32, #tpu.memory_space<vmem>>, %arg3: memref<1x1xf32, #tpu.memory_space<vmem>>) attributes {dimension_semantics = [#tpu.dimension_semantics<arbitrary>], iteration_bounds = array<i64: 1>, scalar_prefetch = 0 : i64, scratch_operands = 0 : i64, tpu.core_type = #tpu.core_type<tc>, window_params = [{transform_indices = @transform_0, window_bounds = array<i64: 32, 128>}, {transform_indices = @transform_1, window_bounds = array<i64: 32, 128>}, {pipeline_mode = #tpu.pipeline_mode<synchronous>, transform_indices = @transform_2, window_bounds = array<i64: 1, 1>}]} {
    %c0 = arith.constant 0 : index
    %c0_0 = arith.constant 0 : index
    %0 = vector.load %arg1[%c0, %c0_0] : memref<32x128xf32, #tpu.memory_space<vmem>>, vector<32x128xf32>
    %c0_1 = arith.constant 0 : index
    %c0_2 = arith.constant 0 : index
    %1 = vector.load %arg2[%c0_1, %c0_2] : memref<32x128xf32, #tpu.memory_space<vmem>>, vector<32x128xf32>
    %2 = arith.subf %0, %1 : vector<32x128xf32>
    %3 = arith.mulf %2, %2 : vector<32x128xf32>
    %4 = vector.shape_cast %3 : vector<32x128xf32> to vector<1x32x128xf32>
    %cst = arith.constant dense<0.000000e+00> : vector<1xf32>
    %5 = vector.multi_reduction <add>, %4, %cst [1, 2] : vector<1x32x128xf32> to vector<1xf32>
    %6 = vector.shape_cast %5 : vector<1xf32> to vector<1x1x1xf32>
    %7 = vector.extract %6[0, 0, 0] : f32 from vector<1x1x1xf32>
    %8 = vector.broadcast %7 : f32 to vector<1x1xf32>
    %9 = math.sqrt %8 : vector<1x1xf32>
    %c0_3 = arith.constant 0 : index
    %c0_4 = arith.constant 0 : index
    %10 = vector.load %arg3[%c0_3, %c0_4] : memref<1x1xf32, #tpu.memory_space<vmem>>, vector<1x1xf32>
    tpu.vector_store %arg3[%c0_3, %c0_4], %9 {strides = array<i32>} : memref<1x1xf32, #tpu.memory_space<vmem>>, vector<1x1xf32>,
    return
  }
  func.func @transform_0(%arg0: i32) -> (i32, i32) {
    %c0_i32 = arith.constant 0 : i32
    %c0_i32_0 = arith.constant 0 : i32
    return %arg0, %c0_i32 : i32, i32
  }
  func.func @transform_1(%arg0: i32) -> (i32, i32) {
    %c0_i32 = arith.constant 0 : i32
    %c0_i32_0 = arith.constant 0 : i32
    return %arg0, %c0_i32 : i32, i32
  }
  func.func @transform_2(%arg0: i32) -> (i32, i32) {
    %c0_i32 = arith.constant 0 : i32
    %c0_i32_0 = arith.constant 0 : i32
    %c0_i32_1 = arith.constant 0 : i32
    return %c0_i32, %c0_i32_0 : i32, i32
  }
}

</mosaic_0001>

<llo_original>
// kernel: tpu_custom_call.1
$region0: #{tpu_custom_call.1}
  #allocation0 [shape = 'u32[]', space=smem, size = 0x4, offset = 0x4, fixed_abs, tag = 'smem constant byte address 0x4 - core index']
  #allocation1 [shape = 'u32[144,128]{1,0:T(1,128)}', space=vmem, size = 0x12000, scoped, tag = 'internal scratch']
  %s0 = inlined_call_operand.hbm [shape: f32[32,128], index: 0, kind: input, shape index: {}]
  %s1 = inlined_call_operand.hbm [shape: f32[32,128], index: 1, kind: input, shape index: {}]
  %s2 = inlined_call_operand.hbm [shape: f32[1,1], index: 2, kind: output, shape index: {}]
  %s3 = sld [smem:[#allocation0]]
  $region26: #{tpu_custom_call.1} parent=0
    _
  %s5 = ssub.s32 1, %s3
  %s6 = scalar_select 0, %s5, %s3
  $region1: #{tpu_custom_call.1} parent=0
    #allocation2 [shape = 'u8[16384]{0}', space=vmem, size = 0x4000, scoped, tag = 'input window, operand 0, single buffered']
    #allocation3 [shape = 's32[1]{0}', space=sflag, size = 0x4, scoped, tag = 'scoped memory for tpu_custom_call.1']
    #allocation4 [shape = 's32[1]{0}', space=sflag, size = 0x4, scoped, tag = 'scoped memory for tpu_custom_call.1']
    #allocation5 [shape = 'u8[16384]{0}', space=vmem, size = 0x4000, scoped, tag = 'input window, operand 1, single buffered']
    #allocation6 [shape = 's32[1]{0}', space=sflag, size = 0x4, scoped, tag = 'scoped memory for tpu_custom_call.1']
    #allocation7 [shape = 'u8[512]{0}', space=vmem, size = 0x400, scoped, tag = 'output window, operand 0, single buffered']
    %7 = vsyncpa [#allocation3], 0
    %8 = vsyncpa [#allocation6], 0
    %9 = vsyncpa [#allocation4], 0
    // Predicated region
    $region2: #{tpu_custom_call.1} parent=1 // pred_check
      _
    $region3: #{tpu_custom_call.1} parent=1 // pred_check_branch
      %11 = sbr.rel (0) target = $region5
    $region4: #{tpu_custom_call.1} parent=1 // pred_region
      %s13 = ssub.s32 512, 512
      %14 = vsyncadd [#allocation3], %s13
      %s15 = sshll.u32 [#allocation2], 4
      %s16 = int_to_ptr.vmem [resolvable:$true] %s15
      %21 = dma.hbm_to_vmem [thread:$0]  %s0, 512, %s16, [#allocation3], 128, 128, 8
    $region5: #{tpu_custom_call.1} parent=1 // pred_fallthru
      _
    // Predicated region
    $region6: #{tpu_custom_call.1} parent=1 // pred_check
      _
    $region7: #{tpu_custom_call.1} parent=1 // pred_check_branch
      %23 = sbr.rel (0) target = $region9
    $region8: #{tpu_custom_call.1} parent=1 // pred_region
      %s25 = ssub.s32 512, 512
      %26 = vsyncadd [#allocation6], %s25
      %s27 = sshll.u32 [#allocation5], 4
      %s28 = int_to_ptr.vmem [resolvable:$true] %s27
      %33 = dma.hbm_to_vmem [thread:$0]  %s1, 512, %s28, [#allocation6], 128, 128, 8
    $region9: #{tpu_custom_call.1} parent=1 // pred_fallthru
      _
    // Predicated region
    $region10: #{tpu_custom_call.1} parent=1 // pred_check
      _
    $region11: #{tpu_custom_call.1} parent=1 // pred_check_branch
      %35 = sbr.rel (0) target = $region13
    $region12: #{tpu_custom_call.1} parent=1 // pred_region
      %36 = dma.done [#allocation3], 512
    $region13: #{tpu_custom_call.1} parent=1 // pred_fallthru
      _
    // Predicated region
    $region14: #{tpu_custom_call.1} parent=1 // pred_check
      _
    $region15: #{tpu_custom_call.1} parent=1 // pred_check_branch
      %38 = sbr.rel (0) target = $region17
    $region16: #{tpu_custom_call.1} parent=1 // pred_region
      %39 = dma.done [#allocation6], 512
    $region17: #{tpu_custom_call.1} parent=1 // pred_fallthru
      _
    %v40 = vld [vmem:[#allocation2] sm:$0xff]
    %v41 = vld [vmem:[#allocation2 + $0x8] sm:$0xff]
    %v42 = vld [vmem:[#allocation2 + $0x10] sm:$0xff]
    %v43 = vld [vmem:[#allocation2 + $0x18] sm:$0xff]
    %v44 = vld [vmem:[#allocation5] sm:$0xff]
    %v45 = vld [vmem:[#allocation5 + $0x8] sm:$0xff]
    %v46 = vld [vmem:[#allocation5 + $0x10] sm:$0xff]
    %v47 = vld [vmem:[#allocation5 + $0x18] sm:$0xff]
    %v48 = vsub.f32 %v40, %v44
    %v49 = vsub.f32 %v41, %v45
    %v50 = vsub.f32 %v42, %v46
    %v51 = vsub.f32 %v43, %v47
    %v52 = vmul.f32 %v48, %v48
    %v53 = vmul.f32 %v49, %v49
    %v54 = vmul.f32 %v50, %v50
    %v55 = vmul.f32 %v51, %v51
    %v56 = vadd.f32 %v52, %v53
    %v57 = vadd.f32 %v56, %v54
    %v58 = vadd.f32 %v57, %v55
    %59 = vadd.xlane.f32.xlu0 %v58
    %v60 = vpop.xlane.xlu0 %59
    %v61 = vrot.slane %v60, 4
    %v62 = vadd.f32 %v60, %v61
    %v63 = vrot.slane %v62, 2
    %v64 = vadd.f32 %v62, %v63
    %v65 = vrot.slane %v64, 1
    %v66 = vadd.f32 %v64, %v65
    %s67 = vtos %v66
    %v68 = vstv %s67
    %v69 = vrsqrt.pop %v68
    %v70 = vmul.f32 %v68, %v69
    %vm71 = vcmp.eq.f32.partialorder %v68, inf
    %v72 = vsel %vm71, %v68, %v70
    %vm73 = vcmp.eq.f32.partialorder %v68, 0.0
    %v74 = vand.u32 %v68, 2147483648
    %v75 = vsel %vm73, %v74, %v72
    %vm76 = vcmask 0
    %77 = vst.msk [vmem:[#allocation7] sm:$0x1] %vm76, %v75
    // Predicated region
    $region18: #{tpu_custom_call.1} parent=1 // pred_check
      _
    $region19: #{tpu_custom_call.1} parent=1 // pred_check_branch
      %79 = sbr.rel (0) target = $region21
    $region20: #{tpu_custom_call.1} parent=1 // pred_region
      %s81 = ssub.s32 16, 16
      %82 = vsyncadd [#allocation4], %s81
      %s84 = sshll.u32 [#allocation7], 4
      %s85 = int_to_ptr.vmem [resolvable:$true] %s84
      %87 = dma.vmem_to_hbm [thread:$0]  %s85, 16, %s2, [#allocation4]
    $region21: #{tpu_custom_call.1} parent=1 // pred_fallthru
      _
    // Predicated region
    $region22: #{tpu_custom_call.1} parent=1 // pred_check
      _
    $region23: #{tpu_custom_call.1} parent=1 // pred_check_branch
      %89 = sbr.rel (0) target = $region25
    $region24: #{tpu_custom_call.1} parent=1 // pred_region
      %90 = dma.done [#allocation4], 16
    $region25: #{tpu_custom_call.1} parent=1 // pred_fallthru
      _
    %91 = vsyncpa [#allocation3], 1
    %92 = vsyncpa [#allocation6], 1
    %93 = vsyncpa [#allocation4], 1

</llo_original>
